<compile_context>
chip_gen: v7x
topology: tpu7x:2x2x1
jax: 0.10.0
libtpu: 0.0.40
codegen_flags: <defaults>
</compile_context>

<pallas_src>
import functools

import jax
import jax.numpy as jnp
from jax import lax
from jax.experimental import pallas as pl
from jax.experimental.pallas import tpu as pltpu

# Module hyper-parameters (deterministic, from __init__ defaults).
GAMMA_NEG = 4          # integer -> lax.integer_pow (VPU multiplies, no EUP pow)
GAMMA_POS = 1
CLIP = 0.05
ALPHA = 0.25
EPS = 1e-8

_VMEM_CAP = None


def _vmem_capacity_bytes():
    """Physical VMEM per core (cached); conservative v7x-sized fallback."""
    global _VMEM_CAP
    if _VMEM_CAP is None:
        try:
            _VMEM_CAP = int(pltpu.get_tpu_info().vmem_capacity_bytes)
        except Exception:
            _VMEM_CAP = 64 << 20
    return _VMEM_CAP


def _asl_kernel(x_ref, y_ref, out_ref, *, tile_b, tile_c, last_row_block, tail_rows):
    x = x_ref[...].astype(jnp.float32)      # in-vreg cast; no-op if already f32
    y = y_ref[...]                          # caller dtype; y is binarized {0,1}
    pos = y == 1                            # no full-tile f32 cast of y

    # clip > 0 branch (static): xs_neg = clamp(1 - x + clip, 1e-4, 1 - 1e-4)
    xs_neg = jnp.clip(1.0 - x + CLIP, 0.0001, 1.0 - 0.0001)

    # Merged log: y is binary, so each element uses exactly one branch.  The EPS
    # guard lives only on the positive branch (xs_neg is already >= 1e-4).
    xs = jnp.where(pos, jnp.maximum(x, EPS), xs_neg)
    coef = jnp.where(pos, ALPHA, 1.0 - ALPHA)
    loss = coef * jnp.log(xs)

    # Focal re-weighting without jnp.power:
    #   base = 1 - xs_pos*y - xs_neg*(1-y) = 1 - xs ; exponent in {1, 4}
    base = 1.0 - xs
    w = jnp.where(pos,
                  lax.integer_pow(base, GAMMA_POS),
                  lax.integer_pow(base, GAMMA_NEG))
    loss = loss * w

    ones = jnp.where(pos, 1.0, 0.0)

    # Static tail mask: only paid for when B % tile_b != 0 (garbage rows of the
    # last block are zeroed before the reductions; select stops NaN propagation).
    if tail_rows != tile_b:
        i = pl.program_id(0)
        valid = jnp.where(i == last_row_block, tail_rows, tile_b)
        row_mask = lax.broadcasted_iota(jnp.int32, (tile_b, tile_c), 0) < valid
        loss = jnp.where(row_mask, loss, 0.0)
        ones = jnp.where(row_mask, ones, 0.0)

    neg_s = jnp.sum(jnp.where(pos, 0.0, loss))    # == sum(loss * (1 - y))
    all_s = jnp.sum(loss)
    npos_s = jnp.sum(ones)                        # == y.eq(1).float().sum()

    # Lane-dense per-block partials; reduced in the wrapper.
    out_ref[0, 0, 0:1, :] = jnp.full((1, 128), neg_s, jnp.float32)
    out_ref[0, 0, 1:2, :] = jnp.full((1, 128), all_s, jnp.float32)
    out_ref[0, 0, 2:3, :] = jnp.full((1, 128), npos_s, jnp.float32)


def _choose_tile_c(C):
    """Full C for small/odd label spaces; otherwise a <=2048 multiple of 128 dividing C."""
    if C <= 2048 or C % 128 != 0:
        return C
    for cand in range(2048, 127, -128):
        if C % cand == 0:
            return cand
    return C


def _round_rows(rows, B):
    """Round a desired row count down to a legal sublane tile (never whole-batch fallback)."""
    if rows >= B:
        return B
    for step in (32, 16, 8):            # 32 covers int8/bool y packing; 8 is the f32 floor
        r = (rows // step) * step
        if r >= step:
            return r
    return 8 if B >= 8 else B           # tiny target (huge C): smallest legal tile


def _choose_tile_b(B, tile_c, target_x_bytes):
    rows = target_x_bytes // (tile_c * 4)
    if rows >= B:
        rows = -(-B // 2)               # whole batch fits: still split >=2 ways (v7x 2 TCs)
    return _round_rows(int(rows), B)


@jax.jit
def asymmetric_loss_optimized(x, y):
    assert x.ndim == 2 and x.shape == y.shape
    B, C = x.shape

    # Generation-aware block / VMEM sizing.
    vmem_cap = _vmem_capacity_bytes()
    if vmem_cap >= (100 << 20):         # v5e / v6e class parts (128 MiB VMEM)
        target_x_bytes = 10 << 20
        vmem_limit = 100 << 20
    else:                               # v7x class parts (64 MiB VMEM per TC)
        target_x_bytes = 5 << 20
        vmem_limit = 52 << 20

    tile_c = _choose_tile_c(C)
    tile_b = _choose_tile_b(B, tile_c, target_x_bytes)
    grid_bn = pl.cdiv(B, tile_b)
    grid_cn = C // tile_c
    tail_rows = B - (grid_bn - 1) * tile_b

    kernel = functools.partial(
        _asl_kernel, tile_b=tile_b, tile_c=tile_c,
        last_row_block=grid_bn - 1, tail_rows=tail_rows)

    x_bytes = jnp.dtype(x.dtype).itemsize
    y_bytes = jnp.dtype(y.dtype).itemsize

    partials = pl.pallas_call(
        kernel,
        out_shape=jax.ShapeDtypeStruct((grid_bn, grid_cn, 3, 128), jnp.float32),
        grid_spec=pltpu.PrefetchScalarGridSpec(
            num_scalar_prefetch=0,
            grid=(grid_bn, grid_cn),
            in_specs=[
                pl.BlockSpec((tile_b, tile_c), lambda i, j: (i, j)),
                pl.BlockSpec((tile_b, tile_c), lambda i, j: (i, j)),
            ],
            out_specs=pl.BlockSpec((1, 1, 3, 128), lambda i, j: (i, j, 0, 0)),
        ),
        compiler_params=pltpu.CompilerParams(
            dimension_semantics=("parallel", "parallel"),
            vmem_limit_bytes=vmem_limit,
        ),
        cost_estimate=pl.CostEstimate(
            flops=14 * B * C,
            transcendentals=B * C,
            bytes_accessed=B * C * (x_bytes + y_bytes) + grid_bn * grid_cn * 3 * 128 * 4,
        ),
    )(x, y)

    sums = jnp.sum(partials[:, :, :, 0], axis=(0, 1))  # [neg_sum, loss_sum, num_pos]
    neg_sum, loss_sum, num_pos = sums[0], sums[1], sums[2]

    # Final data-dependent branch from the PyTorch forward().  max(num_pos, 1)
    # keeps the unselected branch finite (no inf/NaN if a VJP is ever taken).
    return jnp.where(num_pos == 0.0, -neg_sum, -loss_sum / jnp.maximum(num_pos, 1.0))


def _reference(x, y):
    """Pure-JAX mirror of the PyTorch forward() (no eps clamp, like the module)."""
    anti = 1.0 - y
    xs_pos = x
    xs_neg = jnp.clip(1.0 - x + CLIP, 0.0001, 1.0 - 0.0001)
    loss = ALPHA * y * jnp.log(xs_pos) + (1.0 - ALPHA) * anti * jnp.log(xs_neg)
    w = jnp.power(1.0 - xs_pos * y - xs_neg * anti,
                  GAMMA_POS * y + GAMMA_NEG * anti)
    loss = loss * w
    num_pos = jnp.sum((y == 1.0).astype(jnp.float32))
    return jnp.where(num_pos == 0.0, -jnp.sum(loss * anti),
                     -jnp.sum(loss) / num_pos)


if __name__ == "__main__":
    _vmem_capacity_bytes()   # cache hardware info outside of tracing

    key = jax.random.PRNGKey(0)

    # Second case (B=13) exercises the ragged-batch tail-mask path.
    for (B, C) in ((16, 128), (13, 128)):
        kx, ky = jax.random.split(jax.random.fold_in(key, B))
        # x is consumed as probabilities (log(x) directly) -> generate via sigmoid.
        x = jax.nn.sigmoid(jax.random.normal(kx, (B, C), jnp.float32))
        # y: binarized multi-label targets (0/1 floats)
        y = (jax.random.uniform(ky, (B, C)) < 0.3).astype(jnp.float32)

        out = jax.block_until_ready(asymmetric_loss_optimized(x, y))
        ref = _reference(x, y)
        assert jnp.allclose(out, ref, rtol=1e-5, atol=1e-5), (B, C, out, ref)

    print("KERNEL_OK")
</pallas_src>

<mosaic_0001>
module attributes {stable_mosaic.version = 11 : i64} {
  func.func @_asl_kernel(%arg0: i32, %arg1: i32, %arg2: memref<8x128xf32, #tpu.memory_space<vmem>>, %arg3: memref<8x128xf32, #tpu.memory_space<vmem>>, %arg4: memref<1x1x3x128xf32, #tpu.memory_space<vmem>>) attributes {dimension_semantics = [#tpu.dimension_semantics<parallel>, #tpu.dimension_semantics<parallel>], iteration_bounds = array<i64: 2, 1>, scalar_prefetch = 0 : i64, scratch_operands = 0 : i64, tpu.core_type = #tpu.core_type<tc>, window_params = [{transform_indices = @transform_0, window_bounds = array<i64: 8, 128>}, {transform_indices = @transform_1, window_bounds = array<i64: 8, 128>}, {transform_indices = @transform_2, window_bounds = array<i64: 1, 1, 3, 128>}]} {
    %c0 = arith.constant 0 : index
    %c0_0 = arith.constant 0 : index
    %0 = vector.load %arg2[%c0, %c0_0] : memref<8x128xf32, #tpu.memory_space<vmem>>, vector<8x128xf32>
    %c0_1 = arith.constant 0 : index
    %c0_2 = arith.constant 0 : index
    %1 = vector.load %arg3[%c0_1, %c0_2] : memref<8x128xf32, #tpu.memory_space<vmem>>, vector<8x128xf32>
    %cst = arith.constant 1.000000e+00 : f32
    %2 = vector.broadcast %cst : f32 to vector<8x128xf32>
    %3 = arith.cmpf oeq, %1, %2 : vector<8x128xf32>
    %cst_3 = arith.constant 1.000000e+00 : f32
    %4 = vector.broadcast %cst_3 : f32 to vector<8x128xf32>
    %5 = arith.subf %4, %0 : vector<8x128xf32>
    %cst_4 = arith.constant 5.000000e-02 : f32
    %6 = vector.broadcast %cst_4 : f32 to vector<8x128xf32>
    %7 = arith.addf %5, %6 : vector<8x128xf32>
    %cst_5 = arith.constant 9.99999974E-5 : f32
    %cst_6 = arith.constant 0.999899983 : f32
    %8 = vector.broadcast %cst_5 : f32 to vector<8x128xf32>
    %9 = arith.maximumf %8, %7 : vector<8x128xf32>
    %10 = vector.broadcast %cst_6 : f32 to vector<8x128xf32>
    %11 = arith.minimumf %10, %9 : vector<8x128xf32>
    %cst_7 = arith.constant 9.99999993E-9 : f32
    %12 = vector.broadcast %cst_7 : f32 to vector<8x128xf32>
    %13 = arith.maximumf %0, %12 : vector<8x128xf32>
    %14 = arith.select %3, %13, %11 : vector<8x128xi1>, vector<8x128xf32>
    %cst_8 = arith.constant 2.500000e-01 : f32
    %cst_9 = arith.constant 7.500000e-01 : f32
    %15 = vector.broadcast %cst_8 : f32 to vector<8x128xf32>
    %16 = vector.broadcast %cst_9 : f32 to vector<8x128xf32>
    %17 = arith.select %3, %15, %16 : vector<8x128xi1>, vector<8x128xf32>
    %18 = math.log %14 : vector<8x128xf32>
    %19 = arith.mulf %17, %18 : vector<8x128xf32>
    %cst_10 = arith.constant 1.000000e+00 : f32
    %20 = vector.broadcast %cst_10 : f32 to vector<8x128xf32>
    %21 = arith.subf %20, %14 : vector<8x128xf32>
    %22 = arith.mulf %21, %21 : vector<8x128xf32>
    %23 = arith.mulf %22, %22 : vector<8x128xf32>
    %24 = arith.select %3, %21, %23 : vector<8x128xi1>, vector<8x128xf32>
    %25 = arith.mulf %19, %24 : vector<8x128xf32>
    %cst_11 = arith.constant 1.000000e+00 : f32
    %cst_12 = arith.constant 0.000000e+00 : f32
    %26 = vector.broadcast %cst_11 : f32 to vector<8x128xf32>
    %27 = vector.broadcast %cst_12 : f32 to vector<8x128xf32>
    %28 = arith.select %3, %26, %27 : vector<8x128xi1>, vector<8x128xf32>
    %cst_13 = arith.constant 0.000000e+00 : f32
    %29 = vector.broadcast %cst_13 : f32 to vector<8x128xf32>
    %30 = arith.select %3, %29, %25 : vector<8x128xi1>, vector<8x128xf32>
    %31 = vector.shape_cast %30 : vector<8x128xf32> to vector<1x8x128xf32>
    %cst_14 = arith.constant dense<0.000000e+00> : vector<1xf32>
    %32 = vector.multi_reduction <add>, %31, %cst_14 [1, 2] : vector<1x8x128xf32> to vector<1xf32>
    %33 = vector.shape_cast %32 : vector<1xf32> to vector<1x1x1xf32>
    %34 = vector.extract %33[0, 0, 0] : f32 from vector<1x1x1xf32>
    %35 = vector.shape_cast %25 : vector<8x128xf32> to vector<1x8x128xf32>
    %cst_15 = arith.constant dense<0.000000e+00> : vector<1xf32>
    %36 = vector.multi_reduction <add>, %35, %cst_15 [1, 2] : vector<1x8x128xf32> to vector<1xf32>
    %37 = vector.shape_cast %36 : vector<1xf32> to vector<1x1x1xf32>
    %38 = vector.extract %37[0, 0, 0] : f32 from vector<1x1x1xf32>
    %39 = vector.shape_cast %28 : vector<8x128xf32> to vector<1x8x128xf32>
    %cst_16 = arith.constant dense<0.000000e+00> : vector<1xf32>
    %40 = vector.multi_reduction <add>, %39, %cst_16 [1, 2] : vector<1x8x128xf32> to vector<1xf32>
    %41 = vector.shape_cast %40 : vector<1xf32> to vector<1x1x1xf32>
    %42 = vector.extract %41[0, 0, 0] : f32 from vector<1x1x1xf32>
    %43 = vector.broadcast %34 : f32 to vector<1x128xf32>
    %c0_17 = arith.constant 0 : index
    %c0_18 = arith.constant 0 : index
    %c0_19 = arith.constant 0 : index
    %c0_20 = arith.constant 0 : index
    %44 = vector.load %arg4[%c0_17, %c0_18, %c0_19, %c0_20] : memref<1x1x3x128xf32, #tpu.memory_space<vmem>>, vector<1x1x1x128xf32>
    %45 = vector.shape_cast %44 : vector<1x1x1x128xf32> to vector<1x128xf32>
    %46 = vector.shape_cast %43 : vector<1x128xf32> to vector<1x1x1x128xf32>
    tpu.vector_store %arg4[%c0_17, %c0_18, %c0_19, %c0_20], %46 {strides = array<i32>} : memref<1x1x3x128xf32, #tpu.memory_space<vmem>>, vector<1x1x1x128xf32>,
    %47 = vector.broadcast %38 : f32 to vector<1x128xf32>
    %c0_21 = arith.constant 0 : index
    %c0_22 = arith.constant 0 : index
    %c1 = arith.constant 1 : index
    %c0_23 = arith.constant 0 : index
    %48 = vector.load %arg4[%c0_21, %c0_22, %c1, %c0_23] : memref<1x1x3x128xf32, #tpu.memory_space<vmem>>, vector<1x1x1x128xf32>
    %49 = vector.shape_cast %48 : vector<1x1x1x128xf32> to vector<1x128xf32>
    %50 = vector.shape_cast %47 : vector<1x128xf32> to vector<1x1x1x128xf32>
    tpu.vector_store %arg4[%c0_21, %c0_22, %c1, %c0_23], %50 {strides = array<i32>} : memref<1x1x3x128xf32, #tpu.memory_space<vmem>>, vector<1x1x1x128xf32>,
    %51 = vector.broadcast %42 : f32 to vector<1x128xf32>
    %c0_24 = arith.constant 0 : index
    %c0_25 = arith.constant 0 : index
    %c2 = arith.constant 2 : index
    %c0_26 = arith.constant 0 : index
    %52 = vector.load %arg4[%c0_24, %c0_25, %c2, %c0_26] : memref<1x1x3x128xf32, #tpu.memory_space<vmem>>, vector<1x1x1x128xf32>
    %53 = vector.shape_cast %52 : vector<1x1x1x128xf32> to vector<1x128xf32>
    %54 = vector.shape_cast %51 : vector<1x128xf32> to vector<1x1x1x128xf32>
    tpu.vector_store %arg4[%c0_24, %c0_25, %c2, %c0_26], %54 {strides = array<i32>} : memref<1x1x3x128xf32, #tpu.memory_space<vmem>>, vector<1x1x1x128xf32>,
    return
  }
  func.func @transform_0(%arg0: i32, %arg1: i32) -> (i32, i32) {
    %c0_i32 = arith.constant 0 : i32
    return %arg0, %arg1 : i32, i32
  }
  func.func @transform_1(%arg0: i32, %arg1: i32) -> (i32, i32) {
    %c0_i32 = arith.constant 0 : i32
    return %arg0, %arg1 : i32, i32
  }
  func.func @transform_2(%arg0: i32, %arg1: i32) -> (i32, i32, i32, i32) {
    %c0_i32 = arith.constant 0 : i32
    %c0_i32_0 = arith.constant 0 : i32
    %c0_i32_1 = arith.constant 0 : i32
    return %arg0, %arg1, %c0_i32, %c0_i32_0 : i32, i32, i32, i32
  }
}

</mosaic_0001>

<llo_original>
// kernel: asymmetric_loss_optimized.1
$region0: #{asymmetric_loss_optimized.1}
  #allocation0 [shape = 'u32[]', space=smem, size = 0x4, offset = 0x4, fixed_abs, tag = 'smem constant byte address 0x4 - core index']
  #allocation1 [shape = 'u32[144,128]{1,0:T(1,128)}', space=vmem, size = 0x12000, scoped, tag = 'internal scratch']
  %s0 = inlined_call_operand.hbm [shape: f32[16,128], index: 0, kind: input, shape index: {}]
  %s1 = inlined_call_operand.hbm [shape: f32[16,128], index: 1, kind: input, shape index: {}]
  %s2 = inlined_call_operand.vmem [shape: f32[2,1,3,128], index: 2, kind: output, shape index: {}]
  %s3 = sld [smem:[#allocation0]]
  $region49: #{asymmetric_loss_optimized.1} parent=0
    _
  %s5 = ssub.s32 1, %s3
  %s6 = scalar_select 0, %s5, %s3
  $region1: #{asymmetric_loss_optimized.1} parent=0
    #allocation2 [shape = 'u8[8192]{0}', space=vmem, size = 0x2000, scoped, tag = 'input window, operand 0']
    #allocation3 [shape = 's32[2]{0}', space=sflag, size = 0x8, scoped, tag = 'scoped memory for asymmetric_loss_optimized.1']
    #allocation4 [shape = 'u8[8192]{0}', space=vmem, size = 0x2000, scoped, tag = 'input window, operand 1']
    #allocation5 [shape = 's32[2]{0}', space=sflag, size = 0x8, scoped, tag = 'scoped memory for asymmetric_loss_optimized.1']
    %7 = vsyncpa [#allocation3], 0
    %s8 = scalar_lea.sflag [#allocation3], 1
    %9 = vsyncpa %s8, 0
    %10 = vsyncpa [#allocation5], 0
    %s11 = scalar_lea.sflag [#allocation5], 1
    %12 = vsyncpa %s11, 0
    loop: start=0, step=1, limit=4
    $region2: #{asymmetric_loss_optimized.1} parent=1 // loop_pre_header
      _
    $region3: #{asymmetric_loss_optimized.1} parent=1 // loop_header
      %s14 = sphi 0, %s18
      %p15 = scmp.ge.s32.totalorder %s14, 4
      %s21 = sphi 0, %s33
      %s22 = sphi 0, %s29
      %s23 = sphi 0, %s21
      %s24 = sphi 0, %s22
      %s25 = sphi 0, %s23
      %s26 = sphi 0, %s24
      %s38 = sphi 0, %s40
      %s41 = sphi 0, %s38
      %s42 = sphi 0, %s41
      %s58 = sphi 0, %s42
      %s66 = sphi 0, %s68
      %s69 = sphi 0, %s66
      %s70 = sphi 0, %s69
      %s86 = sphi 0, %s70
      %s94 = sphi 0, %s96
      %s97 = sphi 0, %s94
      %s98 = sphi 0, %s97
      %s114 = sphi 0, %s98
    $region4: #{asymmetric_loss_optimized.1} parent=1 // loop_header_branch
      %17 = sbr.rel (%p15) target = $region8
    $region5: #{asymmetric_loss_optimized.1} parent=1 // loop_body
      %s19 = ssub.s32 %s14, 1
      %s20 = ssub.s32 %s14, 2
      %s27 = sadd.s32 1, %s22
      %p28 = scmp.ge.s32.totalorder %s27, 1
      %s29 = scalar_select %p28, 0, %s27
      %s30 = sadd.s32 1, %s21
      %s31 = scalar_select %p28, %s30, %s21
      %p32 = scmp.ge.s32.totalorder %s31, 2
      %s33 = scalar_select %p32, 0, %s31
      %s34 = ssub.s32 %s21, %s33
      %s35 = ssub.s32 %s22, %s29
      %s36 = sor.u32 %s34, %s35
      %p37 = scmp.eq.s32.totalorder %s36, 0
      %s39 = sadd.s32 %s38, 1
      %s40 = scalar_select %p37, %s38, %s39
      %p43 = pneg %p37
      %p44 = scmp.eq.s32.totalorder %s14, 1
      %p45 = por %p43, %p44
      %p46 = scmp.ne.s32.totalorder %s38, %s41
      %p47 = scmp.eq.s32.totalorder %s14, 0
      %p48 = por %p46, %p47
      %p49 = scmp.ne.s32.totalorder %s38, %s41
      %p50 = scmp.eq.s32.totalorder %s19, 1
      %p51 = por %p49, %p50
      %p52 = scmp.ne.s32.totalorder %s41, %s42
      %p53 = scmp.eq.s32.totalorder %s19, 0
      %p54 = por %p52, %p53
      %p55 = scmp.ne.s32.totalorder %s41, %s42
      %p56 = scmp.eq.s32.totalorder %s20, 1
      %p57 = por %p55, %p56
      %p59 = scmp.ne.s32.totalorder %s42, %s58
      %p60 = scmp.eq.s32.totalorder %s20, 0
      %p61 = por %p59, %p60
      %s62 = ssub.s32 %s21, %s33
      %s63 = ssub.s32 %s22, %s29
      %s64 = sor.u32 %s62, %s63
      %p65 = scmp.eq.s32.totalorder %s64, 0
      %s67 = sadd.s32 %s66, 1
      %s68 = scalar_select %p65, %s66, %s67
      %p71 = pneg %p65
      %p72 = scmp.eq.s32.totalorder %s14, 1
      %p73 = por %p71, %p72
      %p74 = scmp.ne.s32.totalorder %s66, %s69
      %p75 = scmp.eq.s32.totalorder %s14, 0
      %p76 = por %p74, %p75
      %p77 = scmp.ne.s32.totalorder %s66, %s69
      %p78 = scmp.eq.s32.totalorder %s19, 1
      %p79 = por %p77, %p78
      %p80 = scmp.ne.s32.totalorder %s69, %s70
      %p81 = scmp.eq.s32.totalorder %s19, 0
      %p82 = por %p80, %p81
      %p83 = scmp.ne.s32.totalorder %s69, %s70
      %p84 = scmp.eq.s32.totalorder %s20, 1
      %p85 = por %p83, %p84
      %p87 = scmp.ne.s32.totalorder %s70, %s86
      %p88 = scmp.eq.s32.totalorder %s20, 0
      %p89 = por %p87, %p88
      %s90 = ssub.s32 %s21, %s33
      %s91 = ssub.s32 %s22, %s29
      %s92 = sor.u32 %s90, %s91
      %p93 = scmp.eq.s32.totalorder %s92, 0
      %s95 = sadd.s32 %s94, 1
      %s96 = scalar_select %p93, %s94, %s95
      %p99 = pneg %p93
      %p100 = scmp.eq.s32.totalorder %s14, 1
      %p101 = por %p99, %p100
      %p102 = scmp.ne.s32.totalorder %s94, %s97
      %p103 = scmp.eq.s32.totalorder %s14, 0
      %p104 = por %p102, %p103
      %p105 = scmp.ne.s32.totalorder %s94, %s97
      %p106 = scmp.eq.s32.totalorder %s19, 1
      %p107 = por %p105, %p106
      %p108 = scmp.ne.s32.totalorder %s97, %s98
      %p109 = scmp.eq.s32.totalorder %s19, 0
      %p110 = por %p108, %p109
      %p111 = scmp.ne.s32.totalorder %s97, %s98
      %p112 = scmp.eq.s32.totalorder %s20, 1
      %p113 = por %p111, %p112
      %p115 = scmp.ne.s32.totalorder %s98, %s114
      %p116 = scmp.eq.s32.totalorder %s20, 0
      %p117 = por %p115, %p116
      %p118 = scmp.le.s32.totalorder 1, %s14
      %p119 = scmp.lt.s32.totalorder %s14, 3
      %p120 = pnand %p118, %p119
      %p121 = pneg %p120
      // Predicated region
      $region9: #{asymmetric_loss_optimized.1} parent=5 // pred_check
        _
      $region10: #{asymmetric_loss_optimized.1} parent=5 // pred_check_branch
        %123 = sbr.rel (%p120) target = $region12
      $region11: #{asymmetric_loss_optimized.1} parent=5 // pred_region
        %s124 = ssub.s32 %s14, 1
      $region12: #{asymmetric_loss_optimized.1} parent=5 // pred_fallthru
        _
      %p125 = scmp.lt.s32.totalorder %s14, 2
      // Predicated region
      $region13: #{asymmetric_loss_optimized.1} parent=5 // pred_check
        %p126 = pneg %p125
      $region14: #{asymmetric_loss_optimized.1} parent=5 // pred_check_branch
        %128 = sbr.rel (%p126) target = $region16
      $region15: #{asymmetric_loss_optimized.1} parent=5 // pred_region
        // Predicated region
        $region17: #{asymmetric_loss_optimized.1} parent=15 // pred_check
          %p129 = pneg %p48
        $region18: #{asymmetric_loss_optimized.1} parent=15 // pred_check_branch
          %131 = sbr.rel (%p129) target = $region20
        $region19: #{asymmetric_loss_optimized.1} parent=15 // pred_region
          %s132 = sand.u32 %s38, 1
          %s133 = scalar_lea.sflag [#allocation3], %s132
          %s134 = sand.u32 %s38, 1
          %s135 = smul.addr %s134, 8
          %s136 = scalar_lea.vmem [#allocation2], %s135
          %s138 = ssub.s32 128, 128
          %139 = vsyncadd %s133, %s138
          %s140 = sadd.s32 %s22, %s21
          %s141 = smul.addr %s140, 128
          %s142 = scalar_lea.hbm %s0, %s141
          %s144 = sshll.u32 %s136, 4
          %s145 = int_to_ptr.vmem [resolvable:$true] %s144
          %147 = dma.hbm_to_vmem [thread:$0]  %s142, 128, %s145, %s133
        $region20: #{asymmetric_loss_optimized.1} parent=15 // pred_fallthru
          _
        // Predicated region
        $region21: #{asymmetric_loss_optimized.1} parent=15 // pred_check
          %p148 = pneg %p76
        $region22: #{asymmetric_loss_optimized.1} parent=15 // pred_check_branch
          %150 = sbr.rel (%p148) target = $region24
        $region23: #{asymmetric_loss_optimized.1} parent=15 // pred_region
          %s151 = sand.u32 %s66, 1
          %s152 = scalar_lea.sflag [#allocation5], %s151
          %s153 = sand.u32 %s66, 1
          %s154 = smul.addr %s153, 8
          %s155 = scalar_lea.vmem [#allocation4], %s154
          %s157 = ssub.s32 128, 128
          %158 = vsyncadd %s152, %s157
          %s159 = sadd.s32 %s22, %s21
          %s160 = smul.addr %s159, 128
          %s161 = scalar_lea.hbm %s1, %s160
          %s163 = sshll.u32 %s155, 4
          %s164 = int_to_ptr.vmem [resolvable:$true] %s163
          %166 = dma.hbm_to_vmem [thread:$0]  %s161, 128, %s164, %s152
        $region24: #{asymmetric_loss_optimized.1} parent=15 // pred_fallthru
          _
      $region16: #{asymmetric_loss_optimized.1} parent=5 // pred_fallthru
        _
      %p167 = scmp.le.s32.totalorder 1, %s14
      %p168 = scmp.lt.s32.totalorder %s14, 3
      %p169 = pnand %p167, %p168
      %p170 = pneg %p169
      // Predicated region
      $region25: #{asymmetric_loss_optimized.1} parent=5 // pred_check
        _
      $region26: #{asymmetric_loss_optimized.1} parent=5 // pred_check_branch
        %172 = sbr.rel (%p169) target = $region28
      $region27: #{asymmetric_loss_optimized.1} parent=5 // pred_region
        %s173 = ssub.s32 %s14, 1
        %s174 = sand.u32 %s41, 1
        %s175 = scalar_lea.sflag [#allocation3], %s174
        %s176 = sand.u32 %s41, 1
        %s177 = smul.addr %s176, 8
        %s178 = scalar_lea.vmem [#allocation2], %s177
        // Predicated region
        $region29: #{asymmetric_loss_optimized.1} parent=27 // pred_check
          %p179 = pneg %p54
        $region30: #{asymmetric_loss_optimized.1} parent=27 // pred_check_branch
          %181 = sbr.rel (%p179) target = $region32
        $region31: #{asymmetric_loss_optimized.1} parent=27 // pred_region
          %182 = dma.done %s175, 128
        $region32: #{asymmetric_loss_optimized.1} parent=27 // pred_fallthru
          _
        %s183 = sand.u32 %s69, 1
        %s184 = scalar_lea.sflag [#allocation5], %s183
        %s185 = sand.u32 %s69, 1
        %s186 = smul.addr %s185, 8
        %s187 = scalar_lea.vmem [#allocation4], %s186
        // Predicated region
        $region33: #{asymmetric_loss_optimized.1} parent=27 // pred_check
          %p188 = pneg %p82
        $region34: #{asymmetric_loss_optimized.1} parent=27 // pred_check_branch
          %190 = sbr.rel (%p188) target = $region36
        $region35: #{asymmetric_loss_optimized.1} parent=27 // pred_region
          %191 = dma.done %s184, 128
        $region36: #{asymmetric_loss_optimized.1} parent=27 // pred_fallthru
          _
        %s192 = sand.u32 %s41, 1
        %s193 = scalar_lea.sflag [#allocation3], %s192
        %s194 = sand.u32 %s41, 1
        %s195 = smul.addr %s194, 8
        %s196 = scalar_lea.vmem [#allocation2], %s195
        %p197 = pneg %p54
        %p198 = pneg %p51
        %s199 = sand.u32 %s69, 1
        %s200 = scalar_lea.sflag [#allocation5], %s199
        %s201 = sand.u32 %s69, 1
        %s202 = smul.addr %s201, 8
        %s203 = scalar_lea.vmem [#allocation4], %s202
        %p204 = pneg %p82
        %p205 = pneg %p79
        %p206 = pneg %p110
        %p207 = pneg %p107
        %p208 = scmp.lt.s32.totalorder %s23, 1
        %s209 = scalar_select %p208, %s23, 1
        %p210 = scmp.lt.s32.totalorder %s24, 0
        %s211 = scalar_select %p210, %s24, 0
        %s212 = sadd.s32 %s211, %s209
        %s213 = smul.addr %s212, 4
        %s214 = scalar_lea.vmem %s2, %s213
        %p215 = scmp.lt.s32.totalorder %s23, 1
        %s216 = scalar_select %p215, %s23, 1
        %p217 = scmp.lt.s32.totalorder %s24, 0
        %s218 = scalar_select %p217, %s24, 0
        %s219 = sadd.s32 %s218, %s216
        %s220 = smul.addr %s219, 4
        %s221 = scalar_lea.vmem %s2, %s220
        %v222 = vld [vmem:[%s178] sm:$0xff]
        %v223 = vld [vmem:[%s187] sm:$0xff]
        %vm224 = vcmp.eq.f32.partialorder %v223, 1.0
        %v225 = vsub.f32 1.0, %v222
        %v226 = vadd.f32 %v225, 0.05
        %v227 = vmax.f32 %v226, 0.0001
        %v228 = vmin.f32 %v227, 0.9999
        %v229 = vmax.f32 %v222, 1e-08
        %v230 = vsel %vm224, %v229, %v228
        %v231 = vsel %vm224, 0.25, 0.75
        %v232 = vlog2.pop %v230
        %v233 = vmul.f32 %v232, 0.6931472
        %v234 = vmul.f32 %v231, %v233
        %v235 = vsub.f32 1.0, %v230
        %v236 = vmul.f32 %v235, %v235
        %v237 = vmul.f32 %v236, %v236
        %v238 = vsel %vm224, %v235, %v237
        %v239 = vmul.f32 %v234, %v238
        %v240 = vsel %vm224, 1.0, 0.0
        %v241 = vsel %vm224, 0.0, %v239
        %242 = vadd.xlane.f32.xlu0 %v241
        %v243 = vpop.xlane.xlu0 %242
        %v244 = vrot.slane %v243, 4
        %v245 = vadd.f32 %v243, %v244
        %v246 = vrot.slane %v245, 2
        %v247 = vadd.f32 %v245, %v246
        %v248 = vrot.slane %v247, 1
        %v249 = vadd.f32 %v247, %v248
        %s250 = vtos %v249
        %251 = vadd.xlane.f32.xlu0 %v239
        %v252 = vpop.xlane.xlu0 %251
        %v253 = vrot.slane %v252, 4
        %v254 = vadd.f32 %v252, %v253
        %v255 = vrot.slane %v254, 2
        %v256 = vadd.f32 %v254, %v255
        %v257 = vrot.slane %v256, 1
        %v258 = vadd.f32 %v256, %v257
        %s259 = vtos %v258
        %260 = vadd.xlane.f32.xlu0 %v240
        %v261 = vpop.xlane.xlu0 %260
        %v262 = vrot.slane %v261, 4
        %v263 = vadd.f32 %v261, %v262
        %v264 = vrot.slane %v263, 2
        %v265 = vadd.f32 %v263, %v264
        %v266 = vrot.slane %v265, 1
        %v267 = vadd.f32 %v265, %v266
        %s268 = vtos %v267
        %v269 = vstv %s250
        %270 = vst [vmem:[%s221] sm:$0x1] %v269
        %v271 = vstv %s259
        %272 = vst [vmem:[%s221 + $0x1] sm:$0x1] %v271
        %v273 = vstv %s268
        %274 = vst [vmem:[%s221 + $0x2] sm:$0x1] %v273
        %p275 = scmp.lt.s32.totalorder %s23, 1
        %s276 = scalar_select %p275, %s23, 1
        %p277 = scmp.lt.s32.totalorder %s24, 0
        %s278 = scalar_select %p277, %s24, 0
        %s279 = sadd.s32 %s278, %s276
        %s280 = smul.addr %s279, 4
        %s281 = scalar_lea.vmem %s2, %s280
        // Predicated region
        $region37: #{asymmetric_loss_optimized.1} parent=27 // pred_check
          %p282 = pneg %p107
        $region38: #{asymmetric_loss_optimized.1} parent=27 // pred_check_branch
          %284 = sbr.rel (%p282) target = $region40
        $region39: #{asymmetric_loss_optimized.1} parent=27 // pred_region
          _
        $region40: #{asymmetric_loss_optimized.1} parent=27 // pred_fallthru
          _
      $region28: #{asymmetric_loss_optimized.1} parent=5 // pred_fallthru
        _
      %p285 = scmp.le.s32.totalorder 2, %s14
      // Predicated region
      $region41: #{asymmetric_loss_optimized.1} parent=5 // pred_check
        %p286 = pneg %p285
      $region42: #{asymmetric_loss_optimized.1} parent=5 // pred_check_branch
        %288 = sbr.rel (%p286) target = $region44
      $region43: #{asymmetric_loss_optimized.1} parent=5 // pred_region
        %s289 = ssub.s32 %s14, 2
        // Predicated region
        $region45: #{asymmetric_loss_optimized.1} parent=43 // pred_check
          %p290 = pneg %p113
        $region46: #{asymmetric_loss_optimized.1} parent=43 // pred_check_branch
          %292 = sbr.rel (%p290) target = $region48
        $region47: #{asymmetric_loss_optimized.1} parent=43 // pred_region
          %p293 = scmp.lt.s32.totalorder %s25, 1
          %s294 = scalar_select %p293, %s25, 1
          %p295 = scmp.lt.s32.totalorder %s26, 0
          %s296 = scalar_select %p295, %s26, 0
          %s297 = sadd.s32 %s296, %s294
          %s298 = smul.addr %s297, 4
          %s299 = scalar_lea.vmem %s2, %s298
        $region48: #{asymmetric_loss_optimized.1} parent=43 // pred_fallthru
          _
      $region44: #{asymmetric_loss_optimized.1} parent=5 // pred_fallthru
        _
    $region6: #{asymmetric_loss_optimized.1} parent=1 // loop_footer
      %s18 = sadd.s32 1, %s14
    $region7: #{asymmetric_loss_optimized.1} parent=1 // loop_footer_branch
      %13 = sbr.rel target = $region3
    $region8: #{asymmetric_loss_optimized.1} parent=1 // loop_exit
      _
    %300 = vsyncpa [#allocation3], 1
    %s301 = scalar_lea.sflag [#allocation3], 1
    %302 = vsyncpa %s301, 1
    %303 = vsyncpa [#allocation5], 1
    %s304 = scalar_lea.sflag [#allocation5], 1
    %305 = vsyncpa %s304, 1

</llo_original>
